<compile_context>
chip_gen: v5e
topology: v5e:2x2
jax: 0.10.0
libtpu: 0.0.40
codegen_flags: <defaults>
</compile_context>

<pallas_src>
import functools

import jax
import jax.numpy as jnp
from jax.experimental import pallas as pl
from jax.experimental.pallas import tpu as pltpu


def _round_up(a, b):
    return (a + b - 1) // b * b


def _gated_conv_kernel(x_ref, w_ref, b_ref, o_ref, *, wp, kh, kw):
    """One batch element.

    x_ref: (Cin, FLAT)        bf16 zero-padded image, spatial flattened
                              row-major (row stride wp), flat axis on lanes.
    w_ref: (kh*kw, 2C, Cin)   bf16 fused [conv ; mask_conv] weights (resident).
    b_ref: (2C, 1)            f32 fused biases (resident).
    o_ref: (C, L)             gated output over the stride-1 conv grid, flat
                              with row stride wp (cols >= OW_full are garbage
                              and get sliced off in the wrapper).
    """
    L = o_ref.shape[-1]
    c = o_ref.shape[-2]

    xv = x_ref[...]                                  # single VMEM load, reused by all taps
    acc = jnp.zeros((2 * c, L), jnp.float32)
    for t in range(kh * kw):                         # unrolled (9 taps for a 3x3 kernel)
        i, j = divmod(t, kw)
        off = i * wp + j                             # static lane shift of the flat input
        acc = acc + jnp.dot(w_ref[t], xv[:, off:off + L],
                            preferred_element_type=jnp.float32)

    y = acc + b_ref[...]                             # lane-broadcast (2C, 1) bias
    xb = y[:c, :]                                    # conv branch
    mb = y[c:, :]                                    # mask branch
    act = jnp.where(xb >= 0.0, xb, 0.2 * xb)         # LeakyReLU(0.2)
    o_ref[...] = (act * jax.nn.sigmoid(mb)).astype(o_ref.dtype)


@functools.partial(
    jax.jit, static_argnames=("stride", "padding", "compute_dtype", "out_dtype"))
def gated_conv2d_with_activation(x_nchw, w_x, b_x, w_m, b_m, *,
                                 stride=1, padding=1,
                                 compute_dtype=jnp.bfloat16,
                                 out_dtype=jnp.float32):
    """Forward of GatedConv2dWithActivation (norm_layer=None path).

    x_nchw: (B, Cin, H, W) float32
    w_x, w_m: (Cout, Cin, KH, KW) conv weights (PyTorch OIHW layout)
    b_x, b_m: (Cout,) biases
    returns: (B, Cout, OH, OW) in out_dtype.

    Note: operands are cast to `compute_dtype` (default bf16) with f32 MXU
    accumulation; pass compute_dtype=jnp.float32 for bit-closer parity with
    the f32 PyTorch module at lower MXU throughput.
    """
    B, Cin, H, W = x_nchw.shape
    Cout, _, KH, KW = w_x.shape

    Hp, Wp = H + 2 * padding, W + 2 * padding
    OH_full, OW_full = Hp - KH + 1, Wp - KW + 1      # stride-1 output extent
    assert OH_full >= 1 and OW_full >= 1

    # Lane extent of the kernel output (stride-1 grid over padded width),
    # rounded to 128 for unmasked stores; input flat length covers every
    # shifted tap window and is also lane-aligned.
    L = _round_up(OH_full * Wp, 128)
    max_off = (KH - 1) * Wp + (KW - 1)
    flat_in = _round_up(L + max_off, 128)

    # Cast to bf16 FIRST, then pad / flatten / pad-to-alignment (all cheap,
    # raw-input-sized passes that XLA can fuse; no 9x im2col tensor exists).
    xp = jnp.pad(x_nchw.astype(compute_dtype),
                 ((0, 0), (0, 0), (padding, padding), (padding, padding)))
    xf = xp.reshape(B, Cin, Hp * Wp)
    xf = jnp.pad(xf, ((0, 0), (0, 0), (0, flat_in - Hp * Wp)))

    # Fuse both convolutions: weights reordered to (tap, 2*Cout, Cin), biases (2*Cout, 1).
    wcat = jnp.concatenate([w_x, w_m], axis=0)                    # (2C, Cin, KH, KW)
    wk = jnp.transpose(wcat, (2, 3, 0, 1)).reshape(KH * KW, 2 * Cout, Cin)
    wk = wk.astype(compute_dtype)
    bcat = jnp.concatenate([b_x, b_m], axis=0).reshape(2 * Cout, 1).astype(jnp.float32)

    kernel = functools.partial(_gated_conv_kernel, wp=Wp, kh=KH, kw=KW)

    out = pl.pallas_call(
        kernel,
        out_shape=jax.ShapeDtypeStruct((B, Cout, L), out_dtype),
        grid_spec=pltpu.PrefetchScalarGridSpec(
            num_scalar_prefetch=0,
            grid=(B,),
            in_specs=[
                # Padded flat image: batch squeezed, Cin on sublanes, flat on lanes.
                pl.BlockSpec((None, Cin, flat_in), lambda b: (b, 0, 0)),
                # Fused weights: resident (constant index_map -> fetched once).
                pl.BlockSpec((KH * KW, 2 * Cout, Cin), lambda b: (0, 0, 0)),
                # Fused biases: resident.
                pl.BlockSpec((2 * Cout, 1), lambda b: (0, 0)),
            ],
            out_specs=pl.BlockSpec((None, Cout, L), lambda b: (b, 0, 0)),
        ),
        compiler_params=pltpu.CompilerParams(
            dimension_semantics=("parallel",),
            # Let XLA fuse the cheap pad/cast producer into the input DMA if it
            # can; even unfused, the materialized tensor is only raw-sized bf16.
            allow_input_fusion=[True, False, False],
            vmem_limit_bytes=32 * 1024 * 1024,
        ),
    )(xf, wk, bcat)

    # (B, Cout, L) -> drop flat padding / garbage columns -> NCHW.
    out = out[:, :, :OH_full * Wp].reshape(B, Cout, OH_full, Wp)
    # TODO(synk): stride > 1 recomputes the stride-1 grid and subsamples here;
    # native strided lane reads (pl.ds(..., stride)) in-kernel would avoid it.
    out = out[:, :, ::stride, :OW_full:stride]
    return out


def _reference(x_nchw, w_x, b_x, w_m, b_m, stride, padding, compute_dtype):
    """Pure-JAX reference (lax.conv) with matching operand precision."""
    dn = jax.lax.conv_dimension_numbers(x_nchw.shape, w_x.shape,
                                        ("NCHW", "OIHW", "NCHW"))
    xc = x_nchw.astype(compute_dtype)
    conv = lambda w: jax.lax.conv_general_dilated(
        xc, w.astype(compute_dtype), window_strides=(stride, stride),
        padding=[(padding, padding), (padding, padding)],
        dimension_numbers=dn, preferred_element_type=jnp.float32)
    x = conv(w_x) + b_x[None, :, None, None]
    m = conv(w_m) + b_m[None, :, None, None]
    return jnp.where(x >= 0, x, 0.2 * x) * jax.nn.sigmoid(m)


if __name__ == "__main__":
    # Module config: in_channels=4, out_channels=8, kernel_size=3, stride=1, padding=1.
    B, Cin, H, W = 2, 4, 16, 16
    Cout, KH, KW = 8, 3, 3

    key = jax.random.PRNGKey(0)
    k_x, k_wx, k_wm, k_bx, k_bm = jax.random.split(key, 5)

    x = jax.random.normal(k_x, (B, Cin, H, W), dtype=jnp.float32)

    # kaiming_normal_-style init: std = sqrt(2 / fan_in), fan_in = Cin*KH*KW.
    fan_in = Cin * KH * KW
    std = (2.0 / fan_in) ** 0.5
    w_x = jax.random.normal(k_wx, (Cout, Cin, KH, KW), jnp.float32) * std
    w_m = jax.random.normal(k_wm, (Cout, Cin, KH, KW), jnp.float32) * std
    # PyTorch Conv2d default bias init: U(-1/sqrt(fan_in), 1/sqrt(fan_in)).
    bound = 1.0 / (fan_in ** 0.5)
    b_x = jax.random.uniform(k_bx, (Cout,), jnp.float32, -bound, bound)
    b_m = jax.random.uniform(k_bm, (Cout,), jnp.float32, -bound, bound)

    # --- stride=1, padding=1 (primary config) ---
    out = gated_conv2d_with_activation(x, w_x, b_x, w_m, b_m, stride=1, padding=1)
    out = jax.block_until_ready(out)
    assert out.shape == (B, Cout, H, W)

    # Tight check vs. a reference with the same (bf16-in, f32-accum) numerics.
    ref_bf16 = _reference(x, w_x, b_x, w_m, b_m, 1, 1, jnp.bfloat16)
    assert jnp.allclose(out, ref_bf16, atol=2e-3, rtol=2e-3), "mismatch vs bf16 reference (s=1)"
    # Loose check vs. the full-f32 module semantics (bf16 operand rounding only).
    ref_f32 = _reference(x, w_x, b_x, w_m, b_m, 1, 1, jnp.float32)
    assert jnp.allclose(out, ref_f32, atol=1e-1, rtol=1e-1), "mismatch vs f32 reference (s=1)"

    # --- stride=2 path (same kernel; strided subsample in the wrapper) ---
    out2 = gated_conv2d_with_activation(x, w_x, b_x, w_m, b_m, stride=2, padding=1)
    out2 = jax.block_until_ready(out2)
    assert out2.shape == (B, Cout, 8, 8)
    ref2 = _reference(x, w_x, b_x, w_m, b_m, 2, 1, jnp.bfloat16)
    assert jnp.allclose(out2, ref2, atol=2e-3, rtol=2e-3), "mismatch vs bf16 reference (s=2)"

    print("KERNEL_OK")
</pallas_src>

<mosaic_0001>
module attributes {stable_mosaic.version = 11 : i64} {
  func.func @_gated_conv_kernel(%arg0: i32, %arg1: memref<1x4x512xbf16, #tpu.memory_space<vmem>>, %arg2: memref<9x16x4xbf16, #tpu.memory_space<vmem>>, %arg3: memref<16x1xf32, #tpu.memory_space<vmem>>, %arg4: memref<1x8x384xf32, #tpu.memory_space<vmem>>) attributes {dimension_semantics = [#tpu.dimension_semantics<parallel>], iteration_bounds = array<i64: 2>, scalar_prefetch = 0 : i64, scratch_operands = 0 : i64, tpu.core_type = #tpu.core_type<tc>, window_params = [{transform_indices = @transform_0, window_bounds = array<i64: 1, 4, 512>}, {pipeline_mode = #tpu.pipeline_mode<synchronous>, transform_indices = @transform_1, window_bounds = array<i64: 9, 16, 4>}, {pipeline_mode = #tpu.pipeline_mode<synchronous>, transform_indices = @transform_2, window_bounds = array<i64: 16, 1>}, {transform_indices = @transform_3, window_bounds = array<i64: 1, 8, 384>}]} {
    %c0 = arith.constant 0 : index
    %c0_0 = arith.constant 0 : index
    %c0_1 = arith.constant 0 : index
    %0 = vector.load %arg1[%c0, %c0_0, %c0_1] : memref<1x4x512xbf16, #tpu.memory_space<vmem>>, vector<1x4x512xbf16>
    %1 = vector.shape_cast %0 : vector<1x4x512xbf16> to vector<4x512xbf16>
    %cst = arith.constant 0.000000e+00 : f32
    %2 = vector.broadcast %cst : f32 to vector<16x384xf32>
    %c0_2 = arith.constant 0 : index
    %c0_3 = arith.constant 0 : index
    %c0_4 = arith.constant 0 : index
    %3 = vector.load %arg2[%c0_2, %c0_3, %c0_4] : memref<9x16x4xbf16, #tpu.memory_space<vmem>>, vector<1x16x4xbf16>
    %4 = vector.shape_cast %3 : vector<1x16x4xbf16> to vector<16x4xbf16>
    %5 = vector.extract_strided_slice %1 {offsets = [0, 0], sizes = [4, 384], strides = [1, 1]} : vector<4x512xbf16> to vector<4x384xbf16>
    %cst_5 = arith.constant dense<0.000000e+00> : vector<16x384xf32>
    %6 = tpu.matmul %4, %5, %cst_5 {dimension_numbers = #tpu.dot_dimension_numbers<[1], [0], [0], [1], [0, 0, 1, 1], [], []>} : vector<16x4xbf16>, vector<4x384xbf16>, vector<16x384xf32> -> vector<16x384xf32>
    %7 = arith.addf %2, %6 : vector<16x384xf32>
    %c1 = arith.constant 1 : index
    %c0_6 = arith.constant 0 : index
    %c0_7 = arith.constant 0 : index
    %8 = vector.load %arg2[%c1, %c0_6, %c0_7] : memref<9x16x4xbf16, #tpu.memory_space<vmem>>, vector<1x16x4xbf16>
    %9 = vector.shape_cast %8 : vector<1x16x4xbf16> to vector<16x4xbf16>
    %10 = vector.extract_strided_slice %1 {offsets = [0, 1], sizes = [4, 384], strides = [1, 1]} : vector<4x512xbf16> to vector<4x384xbf16>
    %cst_8 = arith.constant dense<0.000000e+00> : vector<16x384xf32>
    %11 = tpu.matmul %9, %10, %cst_8 {dimension_numbers = #tpu.dot_dimension_numbers<[1], [0], [0], [1], [0, 0, 1, 1], [], []>} : vector<16x4xbf16>, vector<4x384xbf16>, vector<16x384xf32> -> vector<16x384xf32>
    %12 = arith.addf %7, %11 : vector<16x384xf32>
    %c2 = arith.constant 2 : index
    %c0_9 = arith.constant 0 : index
    %c0_10 = arith.constant 0 : index
    %13 = vector.load %arg2[%c2, %c0_9, %c0_10] : memref<9x16x4xbf16, #tpu.memory_space<vmem>>, vector<1x16x4xbf16>
    %14 = vector.shape_cast %13 : vector<1x16x4xbf16> to vector<16x4xbf16>
    %15 = vector.extract_strided_slice %1 {offsets = [0, 2], sizes = [4, 384], strides = [1, 1]} : vector<4x512xbf16> to vector<4x384xbf16>
    %cst_11 = arith.constant dense<0.000000e+00> : vector<16x384xf32>
    %16 = tpu.matmul %14, %15, %cst_11 {dimension_numbers = #tpu.dot_dimension_numbers<[1], [0], [0], [1], [0, 0, 1, 1], [], []>} : vector<16x4xbf16>, vector<4x384xbf16>, vector<16x384xf32> -> vector<16x384xf32>
    %17 = arith.addf %12, %16 : vector<16x384xf32>
    %c3 = arith.constant 3 : index
    %c0_12 = arith.constant 0 : index
    %c0_13 = arith.constant 0 : index
    %18 = vector.load %arg2[%c3, %c0_12, %c0_13] : memref<9x16x4xbf16, #tpu.memory_space<vmem>>, vector<1x16x4xbf16>
    %19 = vector.shape_cast %18 : vector<1x16x4xbf16> to vector<16x4xbf16>
    %20 = vector.extract_strided_slice %1 {offsets = [0, 18], sizes = [4, 384], strides = [1, 1]} : vector<4x512xbf16> to vector<4x384xbf16>
    %cst_14 = arith.constant dense<0.000000e+00> : vector<16x384xf32>
    %21 = tpu.matmul %19, %20, %cst_14 {dimension_numbers = #tpu.dot_dimension_numbers<[1], [0], [0], [1], [0, 0, 1, 1], [], []>} : vector<16x4xbf16>, vector<4x384xbf16>, vector<16x384xf32> -> vector<16x384xf32>
    %22 = arith.addf %17, %21 : vector<16x384xf32>
    %c4 = arith.constant 4 : index
    %c0_15 = arith.constant 0 : index
    %c0_16 = arith.constant 0 : index
    %23 = vector.load %arg2[%c4, %c0_15, %c0_16] : memref<9x16x4xbf16, #tpu.memory_space<vmem>>, vector<1x16x4xbf16>
    %24 = vector.shape_cast %23 : vector<1x16x4xbf16> to vector<16x4xbf16>
    %25 = vector.extract_strided_slice %1 {offsets = [0, 19], sizes = [4, 384], strides = [1, 1]} : vector<4x512xbf16> to vector<4x384xbf16>
    %cst_17 = arith.constant dense<0.000000e+00> : vector<16x384xf32>
    %26 = tpu.matmul %24, %25, %cst_17 {dimension_numbers = #tpu.dot_dimension_numbers<[1], [0], [0], [1], [0, 0, 1, 1], [], []>} : vector<16x4xbf16>, vector<4x384xbf16>, vector<16x384xf32> -> vector<16x384xf32>
    %27 = arith.addf %22, %26 : vector<16x384xf32>
    %c5 = arith.constant 5 : index
    %c0_18 = arith.constant 0 : index
    %c0_19 = arith.constant 0 : index
    %28 = vector.load %arg2[%c5, %c0_18, %c0_19] : memref<9x16x4xbf16, #tpu.memory_space<vmem>>, vector<1x16x4xbf16>
    %29 = vector.shape_cast %28 : vector<1x16x4xbf16> to vector<16x4xbf16>
    %30 = vector.extract_strided_slice %1 {offsets = [0, 20], sizes = [4, 384], strides = [1, 1]} : vector<4x512xbf16> to vector<4x384xbf16>
    %cst_20 = arith.constant dense<0.000000e+00> : vector<16x384xf32>
    %31 = tpu.matmul %29, %30, %cst_20 {dimension_numbers = #tpu.dot_dimension_numbers<[1], [0], [0], [1], [0, 0, 1, 1], [], []>} : vector<16x4xbf16>, vector<4x384xbf16>, vector<16x384xf32> -> vector<16x384xf32>
    %32 = arith.addf %27, %31 : vector<16x384xf32>
    %c6 = arith.constant 6 : index
    %c0_21 = arith.constant 0 : index
    %c0_22 = arith.constant 0 : index
    %33 = vector.load %arg2[%c6, %c0_21, %c0_22] : memref<9x16x4xbf16, #tpu.memory_space<vmem>>, vector<1x16x4xbf16>
    %34 = vector.shape_cast %33 : vector<1x16x4xbf16> to vector<16x4xbf16>
    %35 = vector.extract_strided_slice %1 {offsets = [0, 36], sizes = [4, 384], strides = [1, 1]} : vector<4x512xbf16> to vector<4x384xbf16>
    %cst_23 = arith.constant dense<0.000000e+00> : vector<16x384xf32>
    %36 = tpu.matmul %34, %35, %cst_23 {dimension_numbers = #tpu.dot_dimension_numbers<[1], [0], [0], [1], [0, 0, 1, 1], [], []>} : vector<16x4xbf16>, vector<4x384xbf16>, vector<16x384xf32> -> vector<16x384xf32>
    %37 = arith.addf %32, %36 : vector<16x384xf32>
    %c7 = arith.constant 7 : index
    %c0_24 = arith.constant 0 : index
    %c0_25 = arith.constant 0 : index
    %38 = vector.load %arg2[%c7, %c0_24, %c0_25] : memref<9x16x4xbf16, #tpu.memory_space<vmem>>, vector<1x16x4xbf16>
    %39 = vector.shape_cast %38 : vector<1x16x4xbf16> to vector<16x4xbf16>
    %40 = vector.extract_strided_slice %1 {offsets = [0, 37], sizes = [4, 384], strides = [1, 1]} : vector<4x512xbf16> to vector<4x384xbf16>
    %cst_26 = arith.constant dense<0.000000e+00> : vector<16x384xf32>
    %41 = tpu.matmul %39, %40, %cst_26 {dimension_numbers = #tpu.dot_dimension_numbers<[1], [0], [0], [1], [0, 0, 1, 1], [], []>} : vector<16x4xbf16>, vector<4x384xbf16>, vector<16x384xf32> -> vector<16x384xf32>
    %42 = arith.addf %37, %41 : vector<16x384xf32>
    %c8 = arith.constant 8 : index
    %c0_27 = arith.constant 0 : index
    %c0_28 = arith.constant 0 : index
    %43 = vector.load %arg2[%c8, %c0_27, %c0_28] : memref<9x16x4xbf16, #tpu.memory_space<vmem>>, vector<1x16x4xbf16>
    %44 = vector.shape_cast %43 : vector<1x16x4xbf16> to vector<16x4xbf16>
    %45 = vector.extract_strided_slice %1 {offsets = [0, 38], sizes = [4, 384], strides = [1, 1]} : vector<4x512xbf16> to vector<4x384xbf16>
    %cst_29 = arith.constant dense<0.000000e+00> : vector<16x384xf32>
    %46 = tpu.matmul %44, %45, %cst_29 {dimension_numbers = #tpu.dot_dimension_numbers<[1], [0], [0], [1], [0, 0, 1, 1], [], []>} : vector<16x4xbf16>, vector<4x384xbf16>, vector<16x384xf32> -> vector<16x384xf32>
    %47 = arith.addf %42, %46 : vector<16x384xf32>
    %c0_30 = arith.constant 0 : index
    %c0_31 = arith.constant 0 : index
    %48 = vector.load %arg3[%c0_30, %c0_31] : memref<16x1xf32, #tpu.memory_space<vmem>>, vector<16x1xf32>
    %49 = vector.broadcast %48 : vector<16x1xf32> to vector<16x384xf32>
    %50 = arith.addf %47, %49 : vector<16x384xf32>
    %51 = vector.extract_strided_slice %50 {offsets = [0, 0], sizes = [8, 384], strides = [1, 1]} : vector<16x384xf32> to vector<8x384xf32>
    %52 = vector.extract_strided_slice %50 {offsets = [8, 0], sizes = [8, 384], strides = [1, 1]} : vector<16x384xf32> to vector<8x384xf32>
    %cst_32 = arith.constant 0.000000e+00 : f32
    %53 = vector.broadcast %cst_32 : f32 to vector<8x384xf32>
    %54 = arith.cmpf oge, %51, %53 : vector<8x384xf32>
    %cst_33 = arith.constant 2.000000e-01 : f32
    %55 = vector.broadcast %cst_33 : f32 to vector<8x384xf32>
    %56 = arith.mulf %55, %51 : vector<8x384xf32>
    %57 = arith.select %54, %51, %56 : vector<8x384xi1>, vector<8x384xf32>
    %58 = arith.negf %52 : vector<8x384xf32>
    %59 = math.exp %58 : vector<8x384xf32>
    %cst_34 = arith.constant 1.000000e+00 : f32
    %60 = vector.broadcast %cst_34 : f32 to vector<8x384xf32>
    %61 = arith.addf %60, %59 : vector<8x384xf32>
    %62 = arith.divf %60, %61 : vector<8x384xf32>
    %63 = arith.mulf %57, %62 : vector<8x384xf32>
    %c0_35 = arith.constant 0 : index
    %c0_36 = arith.constant 0 : index
    %c0_37 = arith.constant 0 : index
    %64 = vector.load %arg4[%c0_35, %c0_36, %c0_37] : memref<1x8x384xf32, #tpu.memory_space<vmem>>, vector<1x8x384xf32>
    %65 = vector.shape_cast %64 : vector<1x8x384xf32> to vector<8x384xf32>
    %66 = vector.shape_cast %63 : vector<8x384xf32> to vector<1x8x384xf32>
    tpu.vector_store %arg4[%c0_35, %c0_36, %c0_37], %66 {strides = array<i32>} : memref<1x8x384xf32, #tpu.memory_space<vmem>>, vector<1x8x384xf32>,
    return
  }
  func.func @transform_0(%arg0: i32) -> (i32, i32, i32) {
    %c0_i32 = arith.constant 0 : i32
    %c0_i32_0 = arith.constant 0 : i32
    %c0_i32_1 = arith.constant 0 : i32
    return %arg0, %c0_i32, %c0_i32_0 : i32, i32, i32
  }
  func.func @transform_1(%arg0: i32) -> (i32, i32, i32) {
    %c0_i32 = arith.constant 0 : i32
    %c0_i32_0 = arith.constant 0 : i32
    %c0_i32_1 = arith.constant 0 : i32
    %c0_i32_2 = arith.constant 0 : i32
    return %c0_i32, %c0_i32_0, %c0_i32_1 : i32, i32, i32
  }
  func.func @transform_2(%arg0: i32) -> (i32, i32) {
    %c0_i32 = arith.constant 0 : i32
    %c0_i32_0 = arith.constant 0 : i32
    %c0_i32_1 = arith.constant 0 : i32
    return %c0_i32, %c0_i32_0 : i32, i32
  }
  func.func @transform_3(%arg0: i32) -> (i32, i32, i32) {
    %c0_i32 = arith.constant 0 : i32
    %c0_i32_0 = arith.constant 0 : i32
    %c0_i32_1 = arith.constant 0 : i32
    return %arg0, %c0_i32, %c0_i32_0 : i32, i32, i32
  }
}

</mosaic_0001>

<llo_original>
// kernel: gated_conv2d_with_activation.2
$region0: #{gated_conv2d_with_activation.2}
  #allocation0 [shape = 'u32[]', space=smem, size = 0x4, offset = 0x4, fixed_abs, tag = 'smem constant byte address 0x4 - core index']
  #allocation1 [shape = 'u32[72,128]{1,0:T(1,128)}', space=vmem, size = 0x9000, scoped, tag = 'internal scratch']
  #allocation2 [shape = 'u32[2048]{0}', space=vmem, size = 0x2000, scoped, tag = 'scoped memory for gated_conv2d_with_activation.2']
  #allocation3 [shape = 'u32[2048]{0}', space=vmem, size = 0x2000, scoped, tag = 'scoped memory for gated_conv2d_with_activation.2']
  #allocation4 [shape = 'u32[2048]{0}', space=vmem, size = 0x2000, scoped, tag = 'scoped memory for gated_conv2d_with_activation.2']
  #allocation5 [shape = 'u32[2048]{0}', space=vmem, size = 0x2000, scoped, tag = 'scoped memory for gated_conv2d_with_activation.2']
  #allocation6 [shape = 'u32[2048]{0}', space=vmem, size = 0x2000, scoped, tag = 'scoped memory for gated_conv2d_with_activation.2']
  %s0 = inlined_call_operand.vmem [shape: bf16[9,16,4], index: 0, kind: input, shape index: {}]
  %s1 = inlined_call_operand.vmem [shape: f32[16,1], index: 1, kind: input, shape index: {}]
  %s2 = inlined_call_operand.vmem [shape: bf16[2,4,324], index: 2, kind: input, shape index: {}]
  %s3 = inlined_call_operand.<no memory space> [shape: bf16[], index: 3, kind: input, shape index: {}]
  %s4 = inlined_call_operand.vmem [shape: f32[2,8,384], index: 4, kind: output, shape index: {}]
  %s5 = sld [smem:[#allocation0]]
  $region45: #{gated_conv2d_with_activation.2} parent=0
    _
  %s7 = ssub.s32 1, %s5
  %s8 = scalar_select 0, %s7, %s5
  %v9 = vstv %s3
  %v10 = vunpack.i.l.bf16 %v9
  %v12 = vunpack.i.h.bf16 %v9
  loop: start=0, step=1, limit=4
  $region2: #{gated_conv2d_with_activation.2} parent=0 // loop_pre_header
    _
  $region3: #{gated_conv2d_with_activation.2} parent=0 // loop_header
    %s15 = sphi 0, %s19
    %p16 = scmp.ge.s32.totalorder %s15, 4
    %s25 = sphi 0, %s27
    %s28 = sphi 0, %s25
    %s29 = sphi 0, %s28
    %s45 = sphi 0, %s29
    %s49 = sphi 0, %s49
    %s51 = sphi 0, %s49
    %s52 = sphi 0, %s51
    %s66 = sphi 0, %s52
    %s70 = sphi 0, %s70
    %s72 = sphi 0, %s70
    %s73 = sphi 0, %s72
    %s87 = sphi 0, %s73
    %s93 = sphi 0, %s95
    %s96 = sphi 0, %s93
    %s97 = sphi 0, %s96
    %s113 = sphi 0, %s97
  $region4: #{gated_conv2d_with_activation.2} parent=0 // loop_header_branch
    %18 = sbr.rel (%p16) target = $region8
  $region5: #{gated_conv2d_with_activation.2} parent=0 // loop_body
    %s20 = ssub.s32 %s15, 1
    %s21 = ssub.s32 %s15, 2
    %s22 = sadd.s32 %s15, 1
    %s23 = ssub.s32 %s15, %s22
    %p24 = scmp.eq.s32.totalorder %s23, 0
    %s26 = sadd.s32 %s25, 1
    %s27 = scalar_select %p24, %s25, %s26
    %p30 = pneg %p24
    %p31 = scmp.eq.s32.totalorder %s15, 1
    %p32 = por %p30, %p31
    %p33 = scmp.ne.s32.totalorder %s25, %s28
    %p34 = scmp.eq.s32.totalorder %s15, 0
    %p35 = por %p33, %p34
    %p36 = scmp.ne.s32.totalorder %s25, %s28
    %p37 = scmp.eq.s32.totalorder %s20, 1
    %p38 = por %p36, %p37
    %p39 = scmp.ne.s32.totalorder %s28, %s29
    %p40 = scmp.eq.s32.totalorder %s20, 0
    %p41 = por %p39, %p40
    %p42 = scmp.ne.s32.totalorder %s28, %s29
    %p43 = scmp.eq.s32.totalorder %s21, 1
    %p44 = por %p42, %p43
    %p46 = scmp.ne.s32.totalorder %s29, %s45
    %p47 = scmp.eq.s32.totalorder %s21, 0
    %p48 = por %p46, %p47
    %s50 = sadd.s32 %s49, 1
    %p53 = scmp.eq.s32.totalorder %s15, 1
    %p54 = scmp.ne.s32.totalorder %s49, %s51
    %p55 = scmp.eq.s32.totalorder %s15, 0
    %p56 = por %p54, %p55
    %p57 = scmp.ne.s32.totalorder %s49, %s51
    %p58 = scmp.eq.s32.totalorder %s20, 1
    %p59 = por %p57, %p58
    %p60 = scmp.ne.s32.totalorder %s51, %s52
    %p61 = scmp.eq.s32.totalorder %s20, 0
    %p62 = por %p60, %p61
    %p63 = scmp.ne.s32.totalorder %s51, %s52
    %p64 = scmp.eq.s32.totalorder %s21, 1
    %p65 = por %p63, %p64
    %p67 = scmp.ne.s32.totalorder %s52, %s66
    %p68 = scmp.eq.s32.totalorder %s21, 0
    %p69 = por %p67, %p68
    %s71 = sadd.s32 %s70, 1
    %p74 = scmp.eq.s32.totalorder %s15, 1
    %p75 = scmp.ne.s32.totalorder %s70, %s72
    %p76 = scmp.eq.s32.totalorder %s15, 0
    %p77 = por %p75, %p76
    %p78 = scmp.ne.s32.totalorder %s70, %s72
    %p79 = scmp.eq.s32.totalorder %s20, 1
    %p80 = por %p78, %p79
    %p81 = scmp.ne.s32.totalorder %s72, %s73
    %p82 = scmp.eq.s32.totalorder %s20, 0
    %p83 = por %p81, %p82
    %p84 = scmp.ne.s32.totalorder %s72, %s73
    %p85 = scmp.eq.s32.totalorder %s21, 1
    %p86 = por %p84, %p85
    %p88 = scmp.ne.s32.totalorder %s73, %s87
    %p89 = scmp.eq.s32.totalorder %s21, 0
    %p90 = por %p88, %p89
    %s91 = ssub.s32 %s15, %s22
    %p92 = scmp.eq.s32.totalorder %s91, 0
    %s94 = sadd.s32 %s93, 1
    %s95 = scalar_select %p92, %s93, %s94
    %p98 = pneg %p92
    %p99 = scmp.eq.s32.totalorder %s15, 1
    %p100 = por %p98, %p99
    %p101 = scmp.ne.s32.totalorder %s93, %s96
    %p102 = scmp.eq.s32.totalorder %s15, 0
    %p103 = por %p101, %p102
    %p104 = scmp.ne.s32.totalorder %s93, %s96
    %p105 = scmp.eq.s32.totalorder %s20, 1
    %p106 = por %p104, %p105
    %p107 = scmp.ne.s32.totalorder %s96, %s97
    %p108 = scmp.eq.s32.totalorder %s20, 0
    %p109 = por %p107, %p108
    %p110 = scmp.ne.s32.totalorder %s96, %s97
    %p111 = scmp.eq.s32.totalorder %s21, 1
    %p112 = por %p110, %p111
    %p114 = scmp.ne.s32.totalorder %s97, %s113
    %p115 = scmp.eq.s32.totalorder %s21, 0
    %p116 = por %p114, %p115
    %p117 = scmp.le.s32.totalorder 1, %s15
    %p118 = scmp.lt.s32.totalorder %s15, 3
    %p119 = pnand %p117, %p118
    %p120 = pneg %p119
    // Predicated region
    $region9: #{gated_conv2d_with_activation.2} parent=5 // pred_check
      _
    $region10: #{gated_conv2d_with_activation.2} parent=5 // pred_check_branch
      %122 = sbr.rel (%p119) target = $region12
    $region11: #{gated_conv2d_with_activation.2} parent=5 // pred_region
      %s123 = ssub.s32 %s15, 1
      // Predicated region
      $region13: #{gated_conv2d_with_activation.2} parent=11 // pred_check
        %p124 = pneg %p62
      $region14: #{gated_conv2d_with_activation.2} parent=11 // pred_check_branch
        %126 = sbr.rel (%p124) target = $region16
      $region15: #{gated_conv2d_with_activation.2} parent=11 // pred_region
        _
      $region16: #{gated_conv2d_with_activation.2} parent=11 // pred_fallthru
        _
      // Predicated region
      $region17: #{gated_conv2d_with_activation.2} parent=11 // pred_check
        %p127 = pneg %p83
      $region18: #{gated_conv2d_with_activation.2} parent=11 // pred_check_branch
        %129 = sbr.rel (%p127) target = $region20
      $region19: #{gated_conv2d_with_activation.2} parent=11 // pred_region
        _
      $region20: #{gated_conv2d_with_activation.2} parent=11 // pred_fallthru
        _
    $region12: #{gated_conv2d_with_activation.2} parent=5 // pred_fallthru
      _
    %p130 = scmp.lt.s32.totalorder %s15, 2
    // Predicated region
    $region21: #{gated_conv2d_with_activation.2} parent=5 // pred_check
      %p131 = pneg %p130
    $region22: #{gated_conv2d_with_activation.2} parent=5 // pred_check_branch
      %133 = sbr.rel (%p131) target = $region24
    $region23: #{gated_conv2d_with_activation.2} parent=5 // pred_region
      // Predicated region
      $region25: #{gated_conv2d_with_activation.2} parent=23 // pred_check
        %p134 = pneg %p35
      $region26: #{gated_conv2d_with_activation.2} parent=23 // pred_check_branch
        %136 = sbr.rel (%p134) target = $region28
      $region27: #{gated_conv2d_with_activation.2} parent=23 // pred_region
        %p137 = scmp.lt.s32.totalorder %s15, 1
        %s138 = scalar_select %p137, %s15, 1
        %s139 = smul.addr %s138, 3
        %s140 = smul.addr %s139, 2
        %s141 = scalar_lea.vmem %s2, %s140
      $region28: #{gated_conv2d_with_activation.2} parent=23 // pred_fallthru
        _
    $region24: #{gated_conv2d_with_activation.2} parent=5 // pred_fallthru
      _
    %p142 = scmp.le.s32.totalorder 1, %s15
    %p143 = scmp.lt.s32.totalorder %s15, 3
    %p144 = pnand %p142, %p143
    %p145 = pneg %p144
    // Predicated region
    $region29: #{gated_conv2d_with_activation.2} parent=5 // pred_check
      _
    $region30: #{gated_conv2d_with_activation.2} parent=5 // pred_check_branch
      %147 = sbr.rel (%p144) target = $region32
    $region31: #{gated_conv2d_with_activation.2} parent=5 // pred_region
      #allocation7 [shape = 'u8[4096]{0}', space=vmem, size = 0x1000, dematerialized = true, scoped, tag = 'FusionAdapter Buffer %fusion.1 = bf16[2,4,512]{2,1,0:T(4,128)(2,1)} fusion(%param_2.3, %param_3), kind=kLoop, calls=%fused_computation.2.clone, metadata={op_name="jit(gated_conv2d_with_activation)/jit(_pad)/pad" stack_frame_id=10}']
      %s148 = ssub.s32 %s15, 1
      %p149 = scmp.lt.s32.totalorder %s20, 1
      %s150 = scalar_select %p149, %s20, 1
      %s151 = smul.addr %s150, 3
      %s152 = smul.addr %s151, 2
      %s153 = scalar_lea.vmem %s2, %s152
      %p154 = pneg %p41
      %p155 = pneg %p38
      %p156 = pneg %p62
      %p157 = pneg %p59
      %p158 = pneg %p83
      %p159 = pneg %p80
      %p160 = pneg %p109
      %p161 = pneg %p106
      %p162 = scmp.lt.s32.totalorder %s20, 1
      %s163 = scalar_select %p162, %s20, 1
      %s164 = smul.addr %s163, 3
      %s165 = smul.addr %s164, 8
      %s166 = scalar_lea.vmem %s4, %s165
      %p167 = scmp.lt.s32.totalorder %s20, 1
      %s168 = scalar_select %p167, %s20, 1
      %s169 = smul.addr %s168, 3
      %s170 = smul.addr %s169, 2
      %s171 = scalar_lea.vmem %s2, %s170
      %p172 = scmp.lt.s32.totalorder %s20, 1
      %s173 = scalar_select %p172, %s20, 1
      %s174 = smul.addr %s173, 3
      %s175 = smul.addr %s174, 8
      %s176 = scalar_lea.vmem %s4, %s175
      %s178 = sor.u32 15, 7
      %s179 = sand.u32 %s178, 5
      %s180 = sshrl.u32 %s179, 1
      %s181 = sor.u32 %s179, %s180
      %s182 = sand.u32 3, %s181
      %v183 = vld [vmem:[%s171] sm:%s182]
      %v184 = vunpack.c.l.bf16 %v183
      %v185 = vunpack.c.h.bf16 %v183
      %v186 = vlaneseq
      %v187 = vshrl.u32 %v186, 7
      %vm189 = vcmp.lt.s32.totalorder %v187, 4
      %v190 = vsel %vm189, %v184, %v10
      %v191 = vlaneseq
      %v192 = vand.u32 %v191, 127
      %vm194 = vcmp.lt.s32.totalorder %v192, 324
      %v195 = vsel %vm194, %v190, %v10
      %v196 = vpack.c.bf16 0.0, %v195
      %s198 = ssub.s32 4, 1
      %199 = vst [vmem:[#allocation7] sm:%s198] %v196
      %s200 = scalar_lea.vmem %s171, 2
      %s202 = sor.u32 15, 7
      %s203 = sand.u32 %s202, 5
      %s204 = sshrl.u32 %s203, 1
      %s205 = sor.u32 %s203, %s204
      %s206 = sand.u32 3, %s205
      %v207 = vld [vmem:[%s200] sm:%s206]
      %v208 = vunpack.c.l.bf16 %v207
      %v209 = vunpack.c.h.bf16 %v207
      %v210 = vlaneseq
      %v211 = vshrl.u32 %v210, 7
      %vm213 = vcmp.lt.s32.totalorder %v211, 4
      %v214 = vsel %vm213, %v208, %v10
      %v215 = vlaneseq
      %v216 = vand.u32 %v215, 127
      %v217 = vadd.s32 %v216, 128
      %vm218 = vcmp.lt.s32.totalorder %v217, 324
      %v219 = vsel %vm218, %v214, %v10
      %s220 = scalar_lea.vmem [#allocation7], 2
      %v221 = vpack.c.bf16 0.0, %v219
      %s223 = ssub.s32 4, 1
      %224 = vst [vmem:[%s220] sm:%s223] %v221
      %s225 = scalar_lea.vmem %s171, 4
      %s227 = sor.u32 15, 7
      %s228 = sand.u32 %s227, 5
      %s229 = sshrl.u32 %s228, 1
      %s230 = sor.u32 %s228, %s229
      %s231 = sand.u32 3, %s230
      %v232 = vld [vmem:[%s225] sm:%s231]
      %v233 = vunpack.c.l.bf16 %v232
      %v234 = vunpack.c.h.bf16 %v232
      %v235 = vlaneseq
      %v236 = vshrl.u32 %v235, 7
      %vm238 = vcmp.lt.s32.totalorder %v236, 4
      %v239 = vsel %vm238, %v233, %v10
      %v240 = vlaneseq
      %v241 = vand.u32 %v240, 127
      %v242 = vadd.s32 %v241, 256
      %vm243 = vcmp.lt.s32.totalorder %v242, 324
      %v244 = vsel %vm243, %v239, %v10
      %s245 = scalar_lea.vmem [#allocation7], 4
      %v246 = vpack.c.bf16 0.0, %v244
      %s248 = ssub.s32 4, 1
      %249 = vst [vmem:[%s245] sm:%s248] %v246
      %s250 = scalar_lea.vmem [#allocation7], 6
      %v251 = vpack.c.bf16 0.0, %v10
      %s253 = ssub.s32 4, 1
      %254 = vst [vmem:[%s250] sm:%s253] %v251
      %v256 = vld [vmem:[#allocation7] sm:$0xff]
      %v257 = vld [vmem:[%s0] sm:$0xf]
      %v258 = vld [vmem:[%s0 + $0x4] sm:$0xf]
      %s259 = scalar_lea.vmem %s0, 8
      %v260 = vld [vmem:[%s259] sm:$0xf]
      %v261 = vld [vmem:[%s259 + $0x4] sm:$0xf]
      %v264 = vunpack.c.l.b16 %v260
      %v265 = vunpack.c.l.b16 %v261
      %v266 = vpack.c.b16 %v265, %v264
      %268 = vst [vmem:[#allocation1] ss:$4 sm:$0xff] %v256
      %v269 = vld.sshfl [vmem:[#allocation1] sm:$0xff pattern:$0x73625140]
      %v271 = vld.sshfl [vmem:[#allocation1 + $0x8] sm:$0xff pattern:$0x73625140]
      %v273 = vld.sshfl [vmem:[#allocation1 + $0x10] sm:$0xff pattern:$0x73625140]
      %v275 = vld.sshfl [vmem:[#allocation1 + $0x18] sm:$0xff pattern:$0x73625140]
      %277 = vrot.lane.b32.xlu0 %v269, 127
      %v278 = vpop.permute.xlu0 %277
      %279 = vrot.lane.b32.xlu0 %v271, 127
      %v280 = vpop.permute.xlu0 %279
      %281 = vrot.lane.b32.xlu0 %v273, 127
      %v282 = vpop.permute.xlu0 %281
      %283 = vrot.lane.b32.xlu0 %v275, 127
      %v284 = vpop.permute.xlu0 %283
      %vm285 = vcmask 1039360
      %v286 = vsel %vm285, %v278, %v280
      %v287 = vsel %vm285, %v280, %v282
      %v288 = vsel %vm285, %v282, %v284
      %vm289 = vcmask 31744
      %v291 = vsel %vm289, %v266, 0
      %vm293 = vcmask 1041408
      %v295 = vsel %vm293, %v286, 0
      %v298 = vsel %vm293, %v287, 0
      %v301 = vsel %vm293, %v288, 0
      %303 = vmatpush.bf16.msra.mxu0 0
      %304 = vmatpush.bf16.msra.mxu0 0
      %305 = vmatpush.bf16.msra.mxu0 0
      %306 = vmatpush.bf16.msra.mxu0 0
      %307 = vmatpush.bf16.msra.mxu0 0
      %308 = vmatpush.bf16.msra.mxu0 0
      %309 = vmatpush.bf16.msra.mxu0 0
      %310 = vmatpush.bf16.msra.mxu0 %v295
      %311 = vmatmul.bf16.gmra.mxu0 %v291
      %v312 = vpop.f32.mrf.mxu0
      %v313 = vadd.f32 0.0, %v312
      %v314 = vpop.f32.mrf.mxu0
      %v315 = vadd.f32 0.0, %v314
      %316 = vdwg.mxu0
      %317 = vmatpush.bf16.msra.mxu0 0
      %318 = vmatpush.bf16.msra.mxu0 0
      %319 = vmatpush.bf16.msra.mxu0 0
      %320 = vmatpush.bf16.msra.mxu0 0
      %321 = vmatpush.bf16.msra.mxu0 0
      %322 = vmatpush.bf16.msra.mxu0 0
      %323 = vmatpush.bf16.msra.mxu0 0
      %324 = vmatpush.bf16.msra.mxu0 %v298
      %325 = vmatmul.bf16.gmra.mxu0 %v291
      %v326 = vpop.f32.mrf.mxu0
      %v327 = vadd.f32 0.0, %v326
      %v328 = vpop.f32.mrf.mxu0
      %v329 = vadd.f32 0.0, %v328
      %330 = vdwg.mxu0
      %331 = vmatpush.bf16.msra.mxu0 0
      %332 = vmatpush.bf16.msra.mxu0 0
      %333 = vmatpush.bf16.msra.mxu0 0
      %334 = vmatpush.bf16.msra.mxu0 0
      %335 = vmatpush.bf16.msra.mxu0 0
      %336 = vmatpush.bf16.msra.mxu0 0
      %337 = vmatpush.bf16.msra.mxu0 0
      %338 = vmatpush.bf16.msra.mxu0 %v301
      %339 = vmatmul.bf16.gmra.mxu0 %v291
      %v340 = vpop.f32.mrf.mxu0
      %v341 = vadd.f32 0.0, %v340
      %v342 = vpop.f32.mrf.mxu0
      %v343 = vadd.f32 0.0, %v342
      %344 = vdwg.mxu0
      %v347 = vunpack.c.l.b16 %v257
      %v348 = vunpack.c.l.b16 %v258
      %v349 = vpack.c.b16 %v348, %v347
      %350 = vst [vmem:[#allocation1] ss:$4 sm:$0xff] %v256
      %v351 = vld.sshfl [vmem:[#allocation1] sm:$0xff pattern:$0x73625140]
      %v352 = vld.sshfl [vmem:[#allocation1 + $0x8] sm:$0xff pattern:$0x73625140]
      %v353 = vld.sshfl [vmem:[#allocation1 + $0x10] sm:$0xff pattern:$0x73625140]
      %v355 = vsel %vm289, %v349, 0
      %v357 = vsel %vm293, %v351, 0
      %v359 = vsel %vm293, %v352, 0
      %v361 = vsel %vm293, %v353, 0
      %363 = vmatpush.bf16.msra.mxu0 0
      %364 = vmatpush.bf16.msra.mxu0 0
      %365 = vmatpush.bf16.msra.mxu0 0
      %366 = vmatpush.bf16.msra.mxu0 0
      %367 = vmatpush.bf16.msra.mxu0 0
      %368 = vmatpush.bf16.msra.mxu0 0
      %369 = vmatpush.bf16.msra.mxu0 0
      %370 = vmatpush.bf16.msra.mxu0 %v357
      %371 = vmatmul.bf16.gmra.mxu0 %v355
      %v372 = vpop.f32.mrf.mxu0
      %v373 = vadd.f32 %v313, %v372
      %v374 = vpop.f32.mrf.mxu0
      %v375 = vadd.f32 %v315, %v374
      %376 = vdwg.mxu0
      %377 = vmatpush.bf16.msra.mxu0 0
      %378 = vmatpush.bf16.msra.mxu0 0
      %379 = vmatpush.bf16.msra.mxu0 0
      %380 = vmatpush.bf16.msra.mxu0 0
      %381 = vmatpush.bf16.msra.mxu0 0
      %382 = vmatpush.bf16.msra.mxu0 0
      %383 = vmatpush.bf16.msra.mxu0 0
      %384 = vmatpush.bf16.msra.mxu0 %v359
      %385 = vmatmul.bf16.gmra.mxu0 %v355
      %v386 = vpop.f32.mrf.mxu0
      %v387 = vadd.f32 %v327, %v386
      %v388 = vpop.f32.mrf.mxu0
      %v389 = vadd.f32 %v329, %v388
      %390 = vdwg.mxu0
      %391 = vmatpush.bf16.msra.mxu0 0
      %392 = vmatpush.bf16.msra.mxu0 0
      %393 = vmatpush.bf16.msra.mxu0 0
      %394 = vmatpush.bf16.msra.mxu0 0
      %395 = vmatpush.bf16.msra.mxu0 0
      %396 = vmatpush.bf16.msra.mxu0 0
      %397 = vmatpush.bf16.msra.mxu0 0
      %398 = vmatpush.bf16.msra.mxu0 %v361
      %399 = vmatmul.bf16.gmra.mxu0 %v355
      %v400 = vpop.f32.mrf.mxu0
      %v401 = vadd.f32 %v341, %v400
      %v402 = vpop.f32.mrf.mxu0
      %v403 = vadd.f32 %v343, %v402
      %404 = vdwg.mxu0
      %s405 = scalar_lea.vmem %s0, 16
      %v406 = vld [vmem:[%s405] sm:$0xf]
      %v407 = vld [vmem:[%s405 + $0x4] sm:$0xf]
      %v410 = vunpack.c.l.b16 %v406
      %v411 = vunpack.c.l.b16 %v407
      %v412 = vpack.c.b16 %v411, %v410
      %413 = vst [vmem:[#allocation1] ss:$4 sm:$0xff] %v256
      %v414 = vld.sshfl [vmem:[#allocation1] sm:$0xff pattern:$0x73625140]
      %v416 = vld.sshfl [vmem:[#allocation1 + $0x8] sm:$0xff pattern:$0x73625140]
      %v418 = vld.sshfl [vmem:[#allocation1 + $0x10] sm:$0xff pattern:$0x73625140]
      %v420 = vld.sshfl [vmem:[#allocation1 + $0x18] sm:$0xff pattern:$0x73625140]
      %422 = vrot.lane.b32.xlu0 %v414, 126
      %v423 = vpop.permute.xlu0 %422
      %424 = vrot.lane.b32.xlu0 %v416, 126
      %v425 = vpop.permute.xlu0 %424
      %426 = vrot.lane.b32.xlu0 %v418, 126
      %v427 = vpop.permute.xlu0 %426
      %428 = vrot.lane.b32.xlu0 %v420, 126
      %v429 = vpop.permute.xlu0 %428
      %vm430 = vcmask 1031168
      %v431 = vsel %vm430, %v423, %v425
      %v432 = vsel %vm430, %v425, %v427
      %v433 = vsel %vm430, %v427, %v429
      %v435 = vsel %vm289, %v412, 0
      %v438 = vsel %vm293, %v431, 0
      %v441 = vsel %vm293, %v432, 0
      %v444 = vsel %vm293, %v433, 0
      %446 = vmatpush.bf16.msra.mxu0 0
      %447 = vmatpush.bf16.msra.mxu0 0
      %448 = vmatpush.bf16.msra.mxu0 0
      %449 = vmatpush.bf16.msra.mxu0 0
      %450 = vmatpush.bf16.msra.mxu0 0
      %451 = vmatpush.bf16.msra.mxu0 0
      %452 = vmatpush.bf16.msra.mxu0 0
      %453 = vmatpush.bf16.msra.mxu0 %v438
      %454 = vmatmul.bf16.gmra.mxu0 %v435
      %v455 = vpop.f32.mrf.mxu0
      %v456 = vadd.f32 0.0, %v455
      %v457 = vpop.f32.mrf.mxu0
      %v458 = vadd.f32 0.0, %v457
      %459 = vdwg.mxu0
      %460 = vmatpush.bf16.msra.mxu0 0
      %461 = vmatpush.bf16.msra.mxu0 0
      %462 = vmatpush.bf16.msra.mxu0 0
      %463 = vmatpush.bf16.msra.mxu0 0
      %464 = vmatpush.bf16.msra.mxu0 0
      %465 = vmatpush.bf16.msra.mxu0 0
      %466 = vmatpush.bf16.msra.mxu0 0
      %467 = vmatpush.bf16.msra.mxu0 %v441
      %468 = vmatmul.bf16.gmra.mxu0 %v435
      %v469 = vpop.f32.mrf.mxu0
      %v470 = vadd.f32 0.0, %v469
      %v471 = vpop.f32.mrf.mxu0
      %v472 = vadd.f32 0.0, %v471
      %473 = vdwg.mxu0
      %474 = vmatpush.bf16.msra.mxu0 0
      %475 = vmatpush.bf16.msra.mxu0 0
      %476 = vmatpush.bf16.msra.mxu0 0
      %477 = vmatpush.bf16.msra.mxu0 0
      %478 = vmatpush.bf16.msra.mxu0 0
      %479 = vmatpush.bf16.msra.mxu0 0
      %480 = vmatpush.bf16.msra.mxu0 0
      %481 = vmatpush.bf16.msra.mxu0 %v444
      %482 = vmatmul.bf16.gmra.mxu0 %v435
      %v483 = vpop.f32.mrf.mxu0
      %v484 = vadd.f32 0.0, %v483
      %v485 = vpop.f32.mrf.mxu0
      %v486 = vadd.f32 0.0, %v485
      %487 = vdwg.mxu0
      %v488 = vadd.f32 %v373, %v456
      %v489 = vadd.f32 %v387, %v470
      %v490 = vadd.f32 %v401, %v484
      %v491 = vadd.f32 %v375, %v458
      %v492 = vadd.f32 %v389, %v472
      %v493 = vadd.f32 %v403, %v486
      %s494 = scalar_lea.vmem %s0, 24
      %v495 = vld [vmem:[%s494] sm:$0xf]
      %v496 = vld [vmem:[%s494 + $0x4] sm:$0xf]
      %v499 = vunpack.c.l.b16 %v495
      %v500 = vunpack.c.l.b16 %v496
      %v501 = vpack.c.b16 %v500, %v499
      %502 = vst [vmem:[#allocation1] ss:$4 sm:$0xff] %v256
      %v503 = vld.sshfl [vmem:[#allocation1] sm:$0xff pattern:$0x73625140]
      %v505 = vld.sshfl [vmem:[#allocation1 + $0x8] sm:$0xff pattern:$0x73625140]
      %v507 = vld.sshfl [vmem:[#allocation1 + $0x10] sm:$0xff pattern:$0x73625140]
      %v509 = vld.sshfl [vmem:[#allocation1 + $0x18] sm:$0xff pattern:$0x73625140]
      %511 = vrot.lane.b32.xlu0 %v503, 110
      %v512 = vpop.permute.xlu0 %511
      %513 = vrot.lane.b32.xlu0 %v505, 110
      %v514 = vpop.permute.xlu0 %513
      %515 = vrot.lane.b32.xlu0 %v507, 110
      %v516 = vpop.permute.xlu0 %515
      %517 = vrot.lane.b32.xlu0 %v509, 110
      %v518 = vpop.permute.xlu0 %517
      %vm519 = vcmask 900096
      %v520 = vsel %vm519, %v512, %v514
      %v521 = vsel %vm519, %v514, %v516
      %v522 = vsel %vm519, %v516, %v518
      %v524 = vsel %vm289, %v501, 0
      %v527 = vsel %vm293, %v520, 0
      %v530 = vsel %vm293, %v521, 0
      %v533 = vsel %vm293, %v522, 0
      %535 = vmatpush.bf16.msra.mxu0 0
      %536 = vmatpush.bf16.msra.mxu0 0
      %537 = vmatpush.bf16.msra.mxu0 0
      %538 = vmatpush.bf16.msra.mxu0 0
      %539 = vmatpush.bf16.msra.mxu0 0
      %540 = vmatpush.bf16.msra.mxu0 0
      %541 = vmatpush.bf16.msra.mxu0 0
      %542 = vmatpush.bf16.msra.mxu0 %v527
      %543 = vmatmul.bf16.gmra.mxu0 %v524
      %v544 = vpop.f32.mrf.mxu0
      %v545 = vadd.f32 0.0, %v544
      %v546 = vpop.f32.mrf.mxu0
      %v547 = vadd.f32 0.0, %v546
      %548 = vdwg.mxu0
      %549 = vmatpush.bf16.msra.mxu0 0
      %550 = vmatpush.bf16.msra.mxu0 0
      %551 = vmatpush.bf16.msra.mxu0 0
      %552 = vmatpush.bf16.msra.mxu0 0
      %553 = vmatpush.bf16.msra.mxu0 0
      %554 = vmatpush.bf16.msra.mxu0 0
      %555 = vmatpush.bf16.msra.mxu0 0
      %556 = vmatpush.bf16.msra.mxu0 %v530
      %557 = vmatmul.bf16.gmra.mxu0 %v524
      %v558 = vpop.f32.mrf.mxu0
      %v559 = vadd.f32 0.0, %v558
      %v560 = vpop.f32.mrf.mxu0
      %v561 = vadd.f32 0.0, %v560
      %562 = vdwg.mxu0
      %563 = vmatpush.bf16.msra.mxu0 0
      %564 = vmatpush.bf16.msra.mxu0 0
      %565 = vmatpush.bf16.msra.mxu0 0
      %566 = vmatpush.bf16.msra.mxu0 0
      %567 = vmatpush.bf16.msra.mxu0 0
      %568 = vmatpush.bf16.msra.mxu0 0
      %569 = vmatpush.bf16.msra.mxu0 0
      %570 = vmatpush.bf16.msra.mxu0 %v533
      %571 = vmatmul.bf16.gmra.mxu0 %v524
      %v572 = vpop.f32.mrf.mxu0
      %v573 = vadd.f32 0.0, %v572
      %v574 = vpop.f32.mrf.mxu0
      %v575 = vadd.f32 0.0, %v574
      %576 = vdwg.mxu0
      %v577 = vadd.f32 %v488, %v545
      %v578 = vadd.f32 %v489, %v559
      %v579 = vadd.f32 %v490, %v573
      %v580 = vadd.f32 %v491, %v547
      %v581 = vadd.f32 %v492, %v561
      %v582 = vadd.f32 %v493, %v575
      %s583 = scalar_lea.vmem %s0, 32
      %v584 = vld [vmem:[%s583] sm:$0xf]
      %v585 = vld [vmem:[%s583 + $0x4] sm:$0xf]
      %v588 = vunpack.c.l.b16 %v584
      %v589 = vunpack.c.l.b16 %v585
      %v590 = vpack.c.b16 %v589, %v588
      %591 = vst [vmem:[#allocation1] ss:$4 sm:$0xff] %v256
      %v592 = vld.sshfl [vmem:[#allocation1] sm:$0xff pattern:$0x73625140]
      %v594 = vld.sshfl [vmem:[#allocation1 + $0x8] sm:$0xff pattern:$0x73625140]
      %v596 = vld.sshfl [vmem:[#allocation1 + $0x10] sm:$0xff pattern:$0x73625140]
      %v598 = vld.sshfl [vmem:[#allocation1 + $0x18] sm:$0xff pattern:$0x73625140]
      %600 = vrot.lane.b32.xlu0 %v592, 109
      %v601 = vpop.permute.xlu0 %600
      %602 = vrot.lane.b32.xlu0 %v594, 109
      %v603 = vpop.permute.xlu0 %602
      %604 = vrot.lane.b32.xlu0 %v596, 109
      %v605 = vpop.permute.xlu0 %604
      %606 = vrot.lane.b32.xlu0 %v598, 109
      %v607 = vpop.permute.xlu0 %606
      %vm608 = vcmask 891904
      %v609 = vsel %vm608, %v601, %v603
      %v610 = vsel %vm608, %v603, %v605
      %v611 = vsel %vm608, %v605, %v607
      %v613 = vsel %vm289, %v590, 0
      %v616 = vsel %vm293, %v609, 0
      %v619 = vsel %vm293, %v610, 0
      %v622 = vsel %vm293, %v611, 0
      %624 = vmatpush.bf16.msra.mxu0 0
      %625 = vmatpush.bf16.msra.mxu0 0
      %626 = vmatpush.bf16.msra.mxu0 0
      %627 = vmatpush.bf16.msra.mxu0 0
      %628 = vmatpush.bf16.msra.mxu0 0
      %629 = vmatpush.bf16.msra.mxu0 0
      %630 = vmatpush.bf16.msra.mxu0 0
      %631 = vmatpush.bf16.msra.mxu0 %v616
      %632 = vmatmul.bf16.gmra.mxu0 %v613
      %v633 = vpop.f32.mrf.mxu0
      %v634 = vadd.f32 0.0, %v633
      %v635 = vpop.f32.mrf.mxu0
      %v636 = vadd.f32 0.0, %v635
      %637 = vdwg.mxu0
      %638 = vmatpush.bf16.msra.mxu0 0
      %639 = vmatpush.bf16.msra.mxu0 0
      %640 = vmatpush.bf16.msra.mxu0 0
      %641 = vmatpush.bf16.msra.mxu0 0
      %642 = vmatpush.bf16.msra.mxu0 0
      %643 = vmatpush.bf16.msra.mxu0 0
      %644 = vmatpush.bf16.msra.mxu0 0
      %645 = vmatpush.bf16.msra.mxu0 %v619
      %646 = vmatmul.bf16.gmra.mxu0 %v613
      %v647 = vpop.f32.mrf.mxu0
      %v648 = vadd.f32 0.0, %v647
      %v649 = vpop.f32.mrf.mxu0
      %v650 = vadd.f32 0.0, %v649
      %651 = vdwg.mxu0
      %652 = vmatpush.bf16.msra.mxu0 0
      %653 = vmatpush.bf16.msra.mxu0 0
      %654 = vmatpush.bf16.msra.mxu0 0
      %655 = vmatpush.bf16.msra.mxu0 0
      %656 = vmatpush.bf16.msra.mxu0 0
      %657 = vmatpush.bf16.msra.mxu0 0
      %658 = vmatpush.bf16.msra.mxu0 0
      %659 = vmatpush.bf16.msra.mxu0 %v622
      %660 = vmatmul.bf16.gmra.mxu0 %v613
      %v661 = vpop.f32.mrf.mxu0
      %v662 = vadd.f32 0.0, %v661
      %v663 = vpop.f32.mrf.mxu0
      %v664 = vadd.f32 0.0, %v663
      %665 = vdwg.mxu0
      %v666 = vadd.f32 %v577, %v634
      %v667 = vadd.f32 %v578, %v648
      %v668 = vadd.f32 %v579, %v662
      %v669 = vadd.f32 %v580, %v636
      %v670 = vadd.f32 %v581, %v650
      %v671 = vadd.f32 %v582, %v664
      %s672 = scalar_lea.vmem %s0, 40
      %v673 = vld [vmem:[%s672] sm:$0xf]
      %v674 = vld [vmem:[%s672 + $0x4] sm:$0xf]
      %v677 = vunpack.c.l.b16 %v673
      %v678 = vunpack.c.l.b16 %v674
      %v679 = vpack.c.b16 %v678, %v677
      %680 = vst [vmem:[#allocation1] ss:$4 sm:$0xff] %v256
      %v681 = vld.sshfl [vmem:[#allocation1] sm:$0xff pattern:$0x73625140]
      %v683 = vld.sshfl [vmem:[#allocation1 + $0x8] sm:$0xff pattern:$0x73625140]
      %v685 = vld.sshfl [vmem:[#allocation1 + $0x10] sm:$0xff pattern:$0x73625140]
      %v687 = vld.sshfl [vmem:[#allocation1 + $0x18] sm:$0xff pattern:$0x73625140]
      %689 = vrot.lane.b32.xlu0 %v681, 108
      %v690 = vpop.permute.xlu0 %689
      %691 = vrot.lane.b32.xlu0 %v683, 108
      %v692 = vpop.permute.xlu0 %691
      %693 = vrot.lane.b32.xlu0 %v685, 108
      %v694 = vpop.permute.xlu0 %693
      %695 = vrot.lane.b32.xlu0 %v687, 108
      %v696 = vpop.permute.xlu0 %695
      %vm697 = vcmask 883712
      %v698 = vsel %vm697, %v690, %v692
      %v699 = vsel %vm697, %v692, %v694
      %v700 = vsel %vm697, %v694, %v696
      %v702 = vsel %vm289, %v679, 0
      %v705 = vsel %vm293, %v698, 0
      %v708 = vsel %vm293, %v699, 0
      %v711 = vsel %vm293, %v700, 0
      %713 = vmatpush.bf16.msra.mxu0 0
      %714 = vmatpush.bf16.msra.mxu0 0
      %715 = vmatpush.bf16.msra.mxu0 0
      %716 = vmatpush.bf16.msra.mxu0 0
      %717 = vmatpush.bf16.msra.mxu0 0
      %718 = vmatpush.bf16.msra.mxu0 0
      %719 = vmatpush.bf16.msra.mxu0 0
      %720 = vmatpush.bf16.msra.mxu0 %v705
      %721 = vmatmul.bf16.gmra.mxu0 %v702
      %v722 = vpop.f32.mrf.mxu0
      %v723 = vadd.f32 0.0, %v722
      %v724 = vpop.f32.mrf.mxu0
      %v725 = vadd.f32 0.0, %v724
      %726 = vdwg.mxu0
      %727 = vmatpush.bf16.msra.mxu0 0
      %728 = vmatpush.bf16.msra.mxu0 0
      %729 = vmatpush.bf16.msra.mxu0 0
      %730 = vmatpush.bf16.msra.mxu0 0
      %731 = vmatpush.bf16.msra.mxu0 0
      %732 = vmatpush.bf16.msra.mxu0 0
      %733 = vmatpush.bf16.msra.mxu0 0
      %734 = vmatpush.bf16.msra.mxu0 %v708
      %735 = vmatmul.bf16.gmra.mxu0 %v702
      %v736 = vpop.f32.mrf.mxu0
      %v737 = vadd.f32 0.0, %v736
      %v738 = vpop.f32.mrf.mxu0
      %v739 = vadd.f32 0.0, %v738
      %740 = vdwg.mxu0
      %741 = vmatpush.bf16.msra.mxu0 0
      %742 = vmatpush.bf16.msra.mxu0 0
      %743 = vmatpush.bf16.msra.mxu0 0
      %744 = vmatpush.bf16.msra.mxu0 0
      %745 = vmatpush.bf16.msra.mxu0 0
      %746 = vmatpush.bf16.msra.mxu0 0
      %747 = vmatpush.bf16.msra.mxu0 0
      %748 = vmatpush.bf16.msra.mxu0 %v711
      %749 = vmatmul.bf16.gmra.mxu0 %v702
      %v750 = vpop.f32.mrf.mxu0
      %v751 = vadd.f32 0.0, %v750
      %v752 = vpop.f32.mrf.mxu0
      %v753 = vadd.f32 0.0, %v752
      %754 = vdwg.mxu0
      %v755 = vadd.f32 %v666, %v723
      %v756 = vadd.f32 %v667, %v737
      %v757 = vadd.f32 %v668, %v751
      %v758 = vadd.f32 %v669, %v725
      %v759 = vadd.f32 %v670, %v739
      %v760 = vadd.f32 %v671, %v753
      %s761 = scalar_lea.vmem %s0, 48
      %v762 = vld [vmem:[%s761] sm:$0xf]
      %v763 = vld [vmem:[%s761 + $0x4] sm:$0xf]
      %v766 = vunpack.c.l.b16 %v762
      %v767 = vunpack.c.l.b16 %v763
      %v768 = vpack.c.b16 %v767, %v766
      %769 = vst [vmem:[#allocation1] ss:$4 sm:$0xff] %v256
      %v770 = vld.sshfl [vmem:[#allocation1] sm:$0xff pattern:$0x73625140]
      %v772 = vld.sshfl [vmem:[#allocation1 + $0x8] sm:$0xff pattern:$0x73625140]
      %v774 = vld.sshfl [vmem:[#allocation1 + $0x10] sm:$0xff pattern:$0x73625140]
      %v776 = vld.sshfl [vmem:[#allocation1 + $0x18] sm:$0xff pattern:$0x73625140]
      %778 = vrot.lane.b32.xlu0 %v770, 92
      %v779 = vpop.permute.xlu0 %778
      %780 = vrot.lane.b32.xlu0 %v772, 92
      %v781 = vpop.permute.xlu0 %780
      %782 = vrot.lane.b32.xlu0 %v774, 92
      %v783 = vpop.permute.xlu0 %782
      %784 = vrot.lane.b32.xlu0 %v776, 92
      %v785 = vpop.permute.xlu0 %784
      %vm786 = vcmask 752640
      %v787 = vsel %vm786, %v779, %v781
      %v788 = vsel %vm786, %v781, %v783
      %v789 = vsel %vm786, %v783, %v785
      %v791 = vsel %vm289, %v768, 0
      %v794 = vsel %vm293, %v787, 0
      %v797 = vsel %vm293, %v788, 0
      %v800 = vsel %vm293, %v789, 0
      %802 = vmatpush.bf16.msra.mxu0 0
      %803 = vmatpush.bf16.msra.mxu0 0
      %804 = vmatpush.bf16.msra.mxu0 0
      %805 = vmatpush.bf16.msra.mxu0 0
      %806 = vmatpush.bf16.msra.mxu0 0
      %807 = vmatpush.bf16.msra.mxu0 0
      %808 = vmatpush.bf16.msra.mxu0 0
      %809 = vmatpush.bf16.msra.mxu0 %v794
      %810 = vmatmul.bf16.gmra.mxu0 %v791
      %v811 = vpop.f32.mrf.mxu0
      %v812 = vadd.f32 0.0, %v811
      %v813 = vpop.f32.mrf.mxu0
      %v814 = vadd.f32 0.0, %v813
      %815 = vdwg.mxu0
      %816 = vmatpush.bf16.msra.mxu0 0
      %817 = vmatpush.bf16.msra.mxu0 0
      %818 = vmatpush.bf16.msra.mxu0 0
      %819 = vmatpush.bf16.msra.mxu0 0
      %820 = vmatpush.bf16.msra.mxu0 0
      %821 = vmatpush.bf16.msra.mxu0 0
      %822 = vmatpush.bf16.msra.mxu0 0
      %823 = vmatpush.bf16.msra.mxu0 %v797
      %824 = vmatmul.bf16.gmra.mxu0 %v791
      %v825 = vpop.f32.mrf.mxu0
      %v826 = vadd.f32 0.0, %v825
      %v827 = vpop.f32.mrf.mxu0
      %v828 = vadd.f32 0.0, %v827
      %829 = vdwg.mxu0
      %830 = vmatpush.bf16.msra.mxu0 0
      %831 = vmatpush.bf16.msra.mxu0 0
      %832 = vmatpush.bf16.msra.mxu0 0
      %833 = vmatpush.bf16.msra.mxu0 0
      %834 = vmatpush.bf16.msra.mxu0 0
      %835 = vmatpush.bf16.msra.mxu0 0
      %836 = vmatpush.bf16.msra.mxu0 0
      %837 = vmatpush.bf16.msra.mxu0 %v800
      %838 = vmatmul.bf16.gmra.mxu0 %v791
      %v839 = vpop.f32.mrf.mxu0
      %v840 = vadd.f32 0.0, %v839
      %v841 = vpop.f32.mrf.mxu0
      %v842 = vadd.f32 0.0, %v841
      %843 = vdwg.mxu0
      %v844 = vadd.f32 %v755, %v812
      %v845 = vadd.f32 %v756, %v826
      %v846 = vadd.f32 %v757, %v840
      %v847 = vadd.f32 %v758, %v814
      %v848 = vadd.f32 %v759, %v828
      %v849 = vadd.f32 %v760, %v842
      %s850 = scalar_lea.vmem %s0, 56
      %v851 = vld [vmem:[%s850] sm:$0xf]
      %v852 = vld [vmem:[%s850 + $0x4] sm:$0xf]
      %v855 = vunpack.c.l.b16 %v851
      %v856 = vunpack.c.l.b16 %v852
      %v857 = vpack.c.b16 %v856, %v855
      %858 = vst [vmem:[#allocation1] ss:$4 sm:$0xff] %v256
      %v859 = vld.sshfl [vmem:[#allocation1] sm:$0xff pattern:$0x73625140]
      %v861 = vld.sshfl [vmem:[#allocation1 + $0x8] sm:$0xff pattern:$0x73625140]
      %v863 = vld.sshfl [vmem:[#allocation1 + $0x10] sm:$0xff pattern:$0x73625140]
      %v865 = vld.sshfl [vmem:[#allocation1 + $0x18] sm:$0xff pattern:$0x73625140]
      %867 = vrot.lane.b32.xlu0 %v859, 91
      %v868 = vpop.permute.xlu0 %867
      %869 = vrot.lane.b32.xlu0 %v861, 91
      %v870 = vpop.permute.xlu0 %869
      %871 = vrot.lane.b32.xlu0 %v863, 91
      %v872 = vpop.permute.xlu0 %871
      %873 = vrot.lane.b32.xlu0 %v865, 91
      %v874 = vpop.permute.xlu0 %873
      %vm875 = vcmask 744448
      %v876 = vsel %vm875, %v868, %v870
      %v877 = vsel %vm875, %v870, %v872
      %v878 = vsel %vm875, %v872, %v874
      %v880 = vsel %vm289, %v857, 0
      %v883 = vsel %vm293, %v876, 0
      %v886 = vsel %vm293, %v877, 0
      %v889 = vsel %vm293, %v878, 0
      %891 = vmatpush.bf16.msra.mxu0 0
      %892 = vmatpush.bf16.msra.mxu0 0
      %893 = vmatpush.bf16.msra.mxu0 0
      %894 = vmatpush.bf16.msra.mxu0 0
      %895 = vmatpush.bf16.msra.mxu0 0
      %896 = vmatpush.bf16.msra.mxu0 0
      %897 = vmatpush.bf16.msra.mxu0 0
      %898 = vmatpush.bf16.msra.mxu0 %v883
      %899 = vmatmul.bf16.gmra.mxu0 %v880
      %v900 = vpop.f32.mrf.mxu0
      %v901 = vadd.f32 0.0, %v900
      %v902 = vpop.f32.mrf.mxu0
      %v903 = vadd.f32 0.0, %v902
      %904 = vdwg.mxu0
      %905 = vmatpush.bf16.msra.mxu0 0
      %906 = vmatpush.bf16.msra.mxu0 0
      %907 = vmatpush.bf16.msra.mxu0 0
      %908 = vmatpush.bf16.msra.mxu0 0
      %909 = vmatpush.bf16.msra.mxu0 0
      %910 = vmatpush.bf16.msra.mxu0 0
      %911 = vmatpush.bf16.msra.mxu0 0
      %912 = vmatpush.bf16.msra.mxu0 %v886
      %913 = vmatmul.bf16.gmra.mxu0 %v880
      %v914 = vpop.f32.mrf.mxu0
      %v915 = vadd.f32 0.0, %v914
      %v916 = vpop.f32.mrf.mxu0
      %v917 = vadd.f32 0.0, %v916
      %918 = vdwg.mxu0
      %919 = vmatpush.bf16.msra.mxu0 0
      %920 = vmatpush.bf16.msra.mxu0 0
      %921 = vmatpush.bf16.msra.mxu0 0
      %922 = vmatpush.bf16.msra.mxu0 0
      %923 = vmatpush.bf16.msra.mxu0 0
      %924 = vmatpush.bf16.msra.mxu0 0
      %925 = vmatpush.bf16.msra.mxu0 0
      %926 = vmatpush.bf16.msra.mxu0 %v889
      %927 = vmatmul.bf16.gmra.mxu0 %v880
      %v928 = vpop.f32.mrf.mxu0
      %v929 = vadd.f32 0.0, %v928
      %v930 = vpop.f32.mrf.mxu0
      %v931 = vadd.f32 0.0, %v930
      %932 = vdwg.mxu0
      %v933 = vadd.f32 %v844, %v901
      %v934 = vadd.f32 %v845, %v915
      %v935 = vadd.f32 %v846, %v929
      %v936 = vadd.f32 %v847, %v903
      %v937 = vadd.f32 %v848, %v917
      %v938 = vadd.f32 %v849, %v931
      %s939 = scalar_lea.vmem %s0, 64
      %v940 = vld [vmem:[%s939] sm:$0xf]
      %v941 = vld [vmem:[%s939 + $0x4] sm:$0xf]
      %v944 = vunpack.c.l.b16 %v940
      %v945 = vunpack.c.l.b16 %v941
      %v946 = vpack.c.b16 %v945, %v944
      %947 = vst [vmem:[#allocation1] ss:$4 sm:$0xff] %v256
      %v948 = vld.sshfl [vmem:[#allocation1] sm:$0xff pattern:$0x73625140]
      %v950 = vld.sshfl [vmem:[#allocation1 + $0x8] sm:$0xff pattern:$0x73625140]
      %v952 = vld.sshfl [vmem:[#allocation1 + $0x10] sm:$0xff pattern:$0x73625140]
      %v954 = vld.sshfl [vmem:[#allocation1 + $0x18] sm:$0xff pattern:$0x73625140]
      %956 = vrot.lane.b32.xlu0 %v948, 90
      %v957 = vpop.permute.xlu0 %956
      %958 = vrot.lane.b32.xlu0 %v950, 90
      %v959 = vpop.permute.xlu0 %958
      %960 = vrot.lane.b32.xlu0 %v952, 90
      %v961 = vpop.permute.xlu0 %960
      %962 = vrot.lane.b32.xlu0 %v954, 90
      %v963 = vpop.permute.xlu0 %962
      %vm964 = vcmask 736256
      %v965 = vsel %vm964, %v957, %v959
      %v966 = vsel %vm964, %v959, %v961
      %v967 = vsel %vm964, %v961, %v963
      %v969 = vsel %vm289, %v946, 0
      %v972 = vsel %vm293, %v965, 0
      %v975 = vsel %vm293, %v966, 0
      %v978 = vsel %vm293, %v967, 0
      %980 = vmatpush.bf16.msra.mxu0 0
      %981 = vmatpush.bf16.msra.mxu0 0
      %982 = vmatpush.bf16.msra.mxu0 0
      %983 = vmatpush.bf16.msra.mxu0 0
      %984 = vmatpush.bf16.msra.mxu0 0
      %985 = vmatpush.bf16.msra.mxu0 0
      %986 = vmatpush.bf16.msra.mxu0 0
      %987 = vmatpush.bf16.msra.mxu0 %v972
      %988 = vmatmul.bf16.gmra.mxu0 %v969
      %v989 = vpop.f32.mrf.mxu0
      %v990 = vadd.f32 0.0, %v989
      %v991 = vpop.f32.mrf.mxu0
      %v992 = vadd.f32 0.0, %v991
      %993 = vdwg.mxu0
      %994 = vmatpush.bf16.msra.mxu0 0
      %995 = vmatpush.bf16.msra.mxu0 0
      %996 = vmatpush.bf16.msra.mxu0 0
      %997 = vmatpush.bf16.msra.mxu0 0
      %998 = vmatpush.bf16.msra.mxu0 0
      %999 = vmatpush.bf16.msra.mxu0 0
      %1000 = vmatpush.bf16.msra.mxu0 0
      %1001 = vmatpush.bf16.msra.mxu0 %v975
      %1002 = vmatmul.bf16.gmra.mxu0 %v969
      %v1003 = vpop.f32.mrf.mxu0
      %v1004 = vadd.f32 0.0, %v1003
      %v1005 = vpop.f32.mrf.mxu0
      %v1006 = vadd.f32 0.0, %v1005
      %1007 = vdwg.mxu0
      %1008 = vmatpush.bf16.msra.mxu0 0
      %1009 = vmatpush.bf16.msra.mxu0 0
      %1010 = vmatpush.bf16.msra.mxu0 0
      %1011 = vmatpush.bf16.msra.mxu0 0
      %1012 = vmatpush.bf16.msra.mxu0 0
      %1013 = vmatpush.bf16.msra.mxu0 0
      %1014 = vmatpush.bf16.msra.mxu0 0
      %1015 = vmatpush.bf16.msra.mxu0 %v978
      %1016 = vmatmul.bf16.gmra.mxu0 %v969
      %v1017 = vpop.f32.mrf.mxu0
      %v1018 = vadd.f32 0.0, %v1017
      %v1019 = vpop.f32.mrf.mxu0
      %v1020 = vadd.f32 0.0, %v1019
      %1021 = vdwg.mxu0
      %v1022 = vadd.f32 %v933, %v990
      %v1023 = vadd.f32 %v934, %v1004
      %v1024 = vadd.f32 %v935, %v1018
      %v1025 = vadd.f32 %v936, %v992
      %v1026 = vadd.f32 %v937, %v1006
      %v1027 = vadd.f32 %v938, %v1020
      %v1028 = vld [vmem:[%s1] sm:$0xff]
      %v1029 = vld [vmem:[%s1 + $0x8] sm:$0xff]
      %1031 = vset.pattern.permute.xlu0 0
      %1032 = vperm.xlu0 %1031, %v1028
      %v1033 = vpop.permute.xlu0 %1032
      %1036 = vset.pattern.permute.xlu0 0
      %1037 = vperm.xlu0 %1036, %v1029
      %v1038 = vpop.permute.xlu0 %1037
      %v1040 = vadd.f32 %v1022, %v1033
      %v1041 = vadd.f32 %v1023, %v1033
      %v1042 = vadd.f32 %v1024, %v1033
      %v1043 = vadd.f32 %v1025, %v1038
      %v1044 = vadd.f32 %v1026, %v1038
      %v1045 = vadd.f32 %v1027, %v1038
      %vm1046 = vcmp.ge.f32.partialorder %v1040, 0.0
      %vm1047 = vcmp.ge.f32.partialorder %v1041, 0.0
      %vm1048 = vcmp.ge.f32.partialorder %v1042, 0.0
      %v1049 = vmul.f32 %v1040, 0.2
      %v1050 = vmul.f32 %v1041, 0.2
      %v1051 = vmul.f32 %v1042, 0.2
      %v1052 = vsel %vm1046, %v1040, %v1049
      %v1053 = vsel %vm1047, %v1041, %v1050
      %v1054 = vsel %vm1048, %v1042, %v1051
      %v1055 = vxor.u32 %v1043, 2147483648
      %v1056 = vxor.u32 %v1044, 2147483648
      %v1057 = vxor.u32 %v1045, 2147483648
      %v1058 = vmul.f32 %v1055, 1.442695
      %v1059 = vpow.pop %v1058
      %v1060 = vmul.f32 %v1056, 1.442695
      %v1061 = vpow.pop %v1060
      %v1062 = vmul.f32 %v1057, 1.442695
      %v1063 = vpow.pop %v1062
      %v1064 = vadd.f32 %v1059, 1.0
      %v1065 = vadd.f32 %v1061, 1.0
      %v1066 = vadd.f32 %v1063, 1.0
      %v1067 = vrcp.pop %v1064
      %v1068 = vmul.f32 %v1064, %v1067
      %v1069 = vsub.f32 1.0, %v1068
      %v1070 = vmul.f32 %v1067, %v1069
      %v1071 = vadd.f32 %v1067, %v1070
      %vm1072 = vweird.f32 %v1064
      %vm1073 = vweird.f32 %v1067
      %vm1074 = vmor %vm1072, %vm1073
      %v1075 = vsel %vm1074, %v1067, %v1071
      %v1076 = vand.u32 2147483647, %v1064
      %vm1077 = vcmp.eq.f32.partialorder %v1076, 8.507059e+37
      %v1078 = vand.u32 %v1064, 2147483648
      %v1079 = vor.u32 1.1754944e-38, %v1078
      %v1080 = vsel %vm1077, %v1079, %v1075
      %v1081 = vmul.f32 1.0, %v1080
      %v1082 = vrcp.pop %v1065
      %v1083 = vmul.f32 %v1065, %v1082
      %v1084 = vsub.f32 1.0, %v1083
      %v1085 = vmul.f32 %v1082, %v1084
      %v1086 = vadd.f32 %v1082, %v1085
      %vm1087 = vweird.f32 %v1065
      %vm1088 = vweird.f32 %v1082
      %vm1089 = vmor %vm1087, %vm1088
      %v1090 = vsel %vm1089, %v1082, %v1086
      %v1091 = vand.u32 2147483647, %v1065
      %vm1092 = vcmp.eq.f32.partialorder %v1091, 8.507059e+37
      %v1093 = vand.u32 %v1065, 2147483648
      %v1094 = vor.u32 1.1754944e-38, %v1093
      %v1095 = vsel %vm1092, %v1094, %v1090
      %v1096 = vmul.f32 1.0, %v1095
      %v1097 = vrcp.pop %v1066
      %v1098 = vmul.f32 %v1066, %v1097
      %v1099 = vsub.f32 1.0, %v1098
      %v1100 = vmul.f32 %v1097, %v1099
      %v1101 = vadd.f32 %v1097, %v1100
      %vm1102 = vweird.f32 %v1066
      %vm1103 = vweird.f32 %v1097
      %vm1104 = vmor %vm1102, %vm1103
      %v1105 = vsel %vm1104, %v1097, %v1101
      %v1106 = vand.u32 2147483647, %v1066
      %vm1107 = vcmp.eq.f32.partialorder %v1106, 8.507059e+37
      %v1108 = vand.u32 %v1066, 2147483648
      %v1109 = vor.u32 1.1754944e-38, %v1108
      %v1110 = vsel %vm1107, %v1109, %v1105
      %v1111 = vmul.f32 1.0, %v1110
      %v1112 = vmul.f32 %v1052, %v1081
      %v1113 = vmul.f32 %v1053, %v1096
      %v1114 = vmul.f32 %v1054, %v1111
      %1115 = vst [vmem:[%s176] sm:$0xff] %v1112
      %1116 = vst [vmem:[%s176 + $0x8] sm:$0xff] %v1113
      %1117 = vst [vmem:[%s176 + $0x10] sm:$0xff] %v1114
      %p1118 = scmp.lt.s32.totalorder %s20, 1
      %s1119 = scalar_select %p1118, %s20, 1
      %s1120 = smul.addr %s1119, 3
      %s1121 = smul.addr %s1120, 8
      %s1122 = scalar_lea.vmem %s4, %s1121
      // Predicated region
      $region33: #{gated_conv2d_with_activation.2} parent=31 // pred_check
        %p1123 = pneg %p106
      $region34: #{gated_conv2d_with_activation.2} parent=31 // pred_check_branch
        %1125 = sbr.rel (%p1123) target = $region36
      $region35: #{gated_conv2d_with_activation.2} parent=31 // pred_region
        _
      $region36: #{gated_conv2d_with_activation.2} parent=31 // pred_fallthru
        _
    $region32: #{gated_conv2d_with_activation.2} parent=5 // pred_fallthru
      _
    %p1126 = scmp.le.s32.totalorder 2, %s15
    // Predicated region
    $region37: #{gated_conv2d_with_activation.2} parent=5 // pred_check
      %p1127 = pneg %p1126
    $region38: #{gated_conv2d_with_activation.2} parent=5 // pred_check_branch
      %1129 = sbr.rel (%p1127) target = $region40
    $region39: #{gated_conv2d_with_activation.2} parent=5 // pred_region
      %s1130 = ssub.s32 %s15, 2
      // Predicated region
      $region41: #{gated_conv2d_with_activation.2} parent=39 // pred_check
        %p1131 = pneg %p112
      $region42: #{gated_conv2d_with_activation.2} parent=39 // pred_check_branch
        %1133 = sbr.rel (%p1131) target = $region44
      $region43: #{gated_conv2d_with_activation.2} parent=39 // pred_region
        %p1134 = scmp.lt.s32.totalorder %s21, 1
        %s1135 = scalar_select %p1134, %s21, 1
        %s1136 = smul.addr %s1135, 3
        %s1137 = smul.addr %s1136, 8
        %s1138 = scalar_lea.vmem %s4, %s1137
      $region44: #{gated_conv2d_with_activation.2} parent=39 // pred_fallthru
        _
    $region40: #{gated_conv2d_with_activation.2} parent=5 // pred_fallthru
      _
  $region6: #{gated_conv2d_with_activation.2} parent=0 // loop_footer
    %s19 = sadd.s32 1, %s15
  $region7: #{gated_conv2d_with_activation.2} parent=0 // loop_footer_branch
    %14 = sbr.rel target = $region3
  $region8: #{gated_conv2d_with_activation.2} parent=0 // loop_exit
    _

</llo_original>
